<compile_context>
chip_gen: v6e
topology: v6e:2x2x1
jax: 0.10.0
libtpu: 0.0.40
codegen_flags: <defaults>
</compile_context>

<pallas_src>
import jax
import jax.numpy as jnp
from jax.experimental import pallas as pl
from jax.experimental.pallas import tpu as pltpu

BN_EPS = 1e-5


# --------------------------------------------------------------------------- #
# Helpers
# --------------------------------------------------------------------------- #
def _cost(flops, bytes_accessed):
    return pl.CostEstimate(flops=int(flops), transcendentals=0,
                           bytes_accessed=int(bytes_accessed))


def _vmem_capacity_bytes():
    """Per-core VMEM capacity; conservative (v7x-sized) fallback."""
    try:
        return int(pltpu.get_tpu_info().vmem_capacity_bytes)
    except Exception:
        return 64 << 20


def _bn_scale_shift(s, ss, n, gamma, beta):
    """Fold training-mode BN + affine into per-feature scale/shift.
    Plain JAX on tiny (1, F) arrays between tiled passes."""
    inv_n = jnp.float32(1.0 / n)
    mean = s * inv_n
    var = jnp.maximum(ss * inv_n - mean * mean, 0.0)   # guard E[x^2]-E[x]^2
    scale = gamma * jax.lax.rsqrt(var + BN_EPS)
    shift = beta - mean * scale
    return scale, shift


def _partial_colsums(h):
    """(tile_b, F) -> (8, F) sublane-grouped partial column sums, so the
    per-tile output block is (8, F) and satisfies the (8, 128) constraint."""
    tb, f = h.shape
    return jnp.sum(h.reshape(tb // 8, 8, f), axis=0)


# --------------------------------------------------------------------------- #
# Single-block fused kernel (whole batch resident in VMEM)
# --------------------------------------------------------------------------- #
def _bn_relu_fused(h, inv_n, gamma, beta):
    s = jnp.sum(h, axis=0, keepdims=True)
    ss = jnp.sum(h * h, axis=0, keepdims=True)
    mean = s * inv_n
    var = jnp.maximum(ss * inv_n - mean * mean, 0.0)
    scale = gamma * jax.lax.rsqrt(var + jnp.float32(BN_EPS))
    shift = beta - mean * scale
    return jnp.maximum(h * scale + shift, 0.0)


def _fused_kernel(x_ref, w1_ref, g1_ref, be1_ref, w2_ref, g2_ref, be2_ref,
                  w3_ref, b3_ref, o_ref):
    n = x_ref.shape[0]
    inv_n = jnp.float32(1.0 / n)

    # Linear(16->256); bias b1 omitted (cancelled by BN mean subtraction).
    h1 = jnp.dot(x_ref[...].astype(jnp.bfloat16), w1_ref[...],
                 preferred_element_type=jnp.float32)
    h1n = _bn_relu_fused(h1, inv_n, g1_ref[...], be1_ref[...])

    # Linear(256->512); bias b2 omitted for the same reason.
    h2 = jnp.dot(h1n.astype(jnp.bfloat16), w2_ref[...],
                 preferred_element_type=jnp.float32)
    h2n = _bn_relu_fused(h2, inv_n, g2_ref[...], be2_ref[...])

    # Linear(512->128) + b3 (kept: no BN follows it).
    out = jnp.dot(h2n.astype(jnp.bfloat16), w3_ref[...],
                  preferred_element_type=jnp.float32) + b3_ref[...]
    o_ref[...] = out.astype(o_ref.dtype)


def _des_projector_fused(x, p):
    n, in_c = x.shape
    h1_c, h2_c = p["w1"].shape[1], p["w2"].shape[1]
    out_c = p["w3"].shape[1]

    w1 = p["w1"].astype(jnp.bfloat16)
    w2 = p["w2"].astype(jnp.bfloat16)
    w3 = p["w3"].astype(jnp.bfloat16)

    flops = 2 * n * (in_c * h1_c + h1_c * h2_c + h2_c * out_c)
    bytes_accessed = (4 * n * (in_c + out_c)
                      + 2 * (in_c * h1_c + h1_c * h2_c + h2_c * out_c)
                      + 8 * (h1_c + h2_c) + 4 * out_c)
    # Live set estimate: f32 activations + bf16 copies + weights, 2x headroom.
    live = (4 * n * (in_c + h1_c + h2_c + out_c)
            + 2 * n * (in_c + h1_c + h2_c)
            + 2 * (in_c * h1_c + h1_c * h2_c + h2_c * out_c)) * 2 + (1 << 20)
    vmem_cap = _vmem_capacity_bytes()
    vmem_limit = int(min(vmem_cap - (8 << 20), max(16 << 20, live)))

    vmem = pl.BlockSpec(memory_space=pltpu.MemorySpace.VMEM)
    args = (x, w1, p["g1"], p["be1"], w2, p["g2"], p["be2"], w3, p["b3"])
    return pl.pallas_call(
        _fused_kernel,
        out_shape=jax.ShapeDtypeStruct((n, out_c), jnp.float32),
        in_specs=[vmem] * len(args),
        out_specs=vmem,
        compiler_params=pltpu.CompilerParams(vmem_limit_bytes=vmem_limit),
        cost_estimate=_cost(flops, bytes_accessed),
    )(*args)


# --------------------------------------------------------------------------- #
# Batch-tiled two-pass-BN path (no h2 spill; megacore-parallel stats passes)
# --------------------------------------------------------------------------- #
def _stats1_kernel(x_ref, w1_ref, s1_ref, ss1_ref):
    # Padded x rows are exactly zero -> h1 rows are exactly zero -> they
    # contribute nothing to either sum (no mask needed here).
    h1 = jnp.dot(x_ref[...].astype(jnp.bfloat16), w1_ref[...],
                 preferred_element_type=jnp.float32)
    s1_ref[...] = _partial_colsums(h1)
    ss1_ref[...] = _partial_colsums(h1 * h1)


def _make_stats2_kernel(n_valid):
    """Stats-only pass B; n_valid (Python int) is closed over statically."""
    def kernel(x_ref, w1s_ref, shift1_ref, w2_ref, s2_ref, ss2_ref):
        tile_b = x_ref.shape[0]
        # BN1 scale is pre-folded into w1s columns; shift1 is the bias.
        h1n = jnp.maximum(
            jnp.dot(x_ref[...].astype(jnp.bfloat16), w1s_ref[...],
                    preferred_element_type=jnp.float32) + shift1_ref[...],
            0.0)
        h2 = jnp.dot(h1n.astype(jnp.bfloat16), w2_ref[...],
                     preferred_element_type=jnp.float32)
        # Mask padded rows (their h1n is relu(shift1) != 0) before stats.
        row = (pl.program_id(0) * tile_b
               + jax.lax.broadcasted_iota(jnp.int32, (tile_b, 1), 0))
        h2 = jnp.where(row < n_valid, h2, 0.0)
        s2_ref[...] = _partial_colsums(h2)
        ss2_ref[...] = _partial_colsums(h2 * h2)
    return kernel


def _layer3_kernel(x_ref, w1s_ref, shift1_ref, w2s_ref, shift2_ref,
                   w3_ref, b3_ref, o_ref):
    # Recompute h1n/h2 instead of spilling h2 to HBM (recompute beats the
    # 2 KB/row HBM round-trip on every TPU generation).
    h1n = jnp.maximum(
        jnp.dot(x_ref[...].astype(jnp.bfloat16), w1s_ref[...],
                preferred_element_type=jnp.float32) + shift1_ref[...],
        0.0)
    # BN2 scale is pre-folded into w2s columns; shift2 is the bias (ReLU is
    # after the fold, so the fold is exact).
    h2n = jnp.maximum(
        jnp.dot(h1n.astype(jnp.bfloat16), w2s_ref[...],
                preferred_element_type=jnp.float32) + shift2_ref[...],
        0.0)
    out = jnp.dot(h2n.astype(jnp.bfloat16), w3_ref[...],
                  preferred_element_type=jnp.float32) + b3_ref[...]
    o_ref[...] = out.astype(o_ref.dtype)


def _des_projector_tiled(x, p, tile_b):
    n, in_c = x.shape
    h1_c, h2_c = p["w1"].shape[1], p["w2"].shape[1]
    out_c = p["w3"].shape[1]
    assert tile_b % 8 == 0 and tile_b > 0, "tile_b must be a multiple of 8"

    nt = -(-n // tile_b)                 # ceil div
    n_pad = nt * tile_b
    if n_pad != n:
        x = jnp.pad(x, ((0, n_pad - n), (0, 0)))

    w1 = p["w1"].astype(jnp.bfloat16)
    w3 = p["w3"].astype(jnp.bfloat16)

    vmem_cap = _vmem_capacity_bytes()
    vmem_limit = int(max(32 << 20, min(vmem_cap - (8 << 20), 64 << 20)))
    cp_parallel = pltpu.CompilerParams(
        dimension_semantics=("parallel",), vmem_limit_bytes=vmem_limit)

    # ---- Pass A: per-tile partial sum / sum-of-squares of h1 = x @ W1 -------
    s1p, ss1p = pl.pallas_call(
        _stats1_kernel,
        grid_spec=pltpu.PrefetchScalarGridSpec(
            num_scalar_prefetch=0,
            grid=(nt,),
            in_specs=[pl.BlockSpec((tile_b, in_c), lambda i: (i, 0)),
                      pl.BlockSpec((in_c, h1_c), lambda i: (0, 0))],
            out_specs=[pl.BlockSpec((8, h1_c), lambda i: (i, 0)),
                       pl.BlockSpec((8, h1_c), lambda i: (i, 0))]),
        out_shape=(jax.ShapeDtypeStruct((nt * 8, h1_c), jnp.float32),
                   jax.ShapeDtypeStruct((nt * 8, h1_c), jnp.float32)),
        compiler_params=cp_parallel,
        cost_estimate=_cost(2 * n_pad * in_c * h1_c,
                            4 * n_pad * in_c + 2 * in_c * h1_c
                            + 8 * nt * 8 * h1_c),
    )(x, w1)
    s1 = jnp.sum(s1p, axis=0, keepdims=True)
    ss1 = jnp.sum(ss1p, axis=0, keepdims=True)
    scale1, shift1 = _bn_scale_shift(s1, ss1, n, p["g1"], p["be1"])
    # Fold BN1 scale into W1's columns once; shift1 becomes the bias.
    w1s = (p["w1"] * scale1).astype(jnp.bfloat16)
    w2 = p["w2"].astype(jnp.bfloat16)

    # ---- Pass B: stats-only (no h2 spill): BN2 sum / sum-of-squares ---------
    s2p, ss2p = pl.pallas_call(
        _make_stats2_kernel(n),
        grid_spec=pltpu.PrefetchScalarGridSpec(
            num_scalar_prefetch=0,
            grid=(nt,),
            in_specs=[pl.BlockSpec((tile_b, in_c), lambda i: (i, 0)),
                      pl.BlockSpec((in_c, h1_c), lambda i: (0, 0)),
                      pl.BlockSpec((1, h1_c), lambda i: (0, 0)),
                      pl.BlockSpec((h1_c, h2_c), lambda i: (0, 0))],
            out_specs=[pl.BlockSpec((8, h2_c), lambda i: (i, 0)),
                       pl.BlockSpec((8, h2_c), lambda i: (i, 0))]),
        out_shape=(jax.ShapeDtypeStruct((nt * 8, h2_c), jnp.float32),
                   jax.ShapeDtypeStruct((nt * 8, h2_c), jnp.float32)),
        compiler_params=cp_parallel,
        cost_estimate=_cost(2 * n_pad * (in_c * h1_c + h1_c * h2_c),
                            4 * n_pad * in_c
                            + 2 * (in_c * h1_c + h1_c * h2_c)
                            + 4 * h1_c + 8 * nt * 8 * h2_c),
    )(x, w1s, shift1, w2)
    s2 = jnp.sum(s2p, axis=0, keepdims=True)
    ss2 = jnp.sum(ss2p, axis=0, keepdims=True)
    scale2, shift2 = _bn_scale_shift(s2, ss2, n, p["g2"], p["be2"])
    # Fold BN2 scale into W2's columns for pass C; shift2 becomes the bias.
    w2s = (p["w2"] * scale2).astype(jnp.bfloat16)

    # ---- Pass C: recompute h1n -> h2, apply BN2 + ReLU, 512->out + b3 -------
    out = pl.pallas_call(
        _layer3_kernel,
        grid_spec=pltpu.PrefetchScalarGridSpec(
            num_scalar_prefetch=0,
            grid=(nt,),
            in_specs=[pl.BlockSpec((tile_b, in_c), lambda i: (i, 0)),
                      pl.BlockSpec((in_c, h1_c), lambda i: (0, 0)),
                      pl.BlockSpec((1, h1_c), lambda i: (0, 0)),
                      pl.BlockSpec((h1_c, h2_c), lambda i: (0, 0)),
                      pl.BlockSpec((1, h2_c), lambda i: (0, 0)),
                      pl.BlockSpec((h2_c, out_c), lambda i: (0, 0)),
                      pl.BlockSpec((1, out_c), lambda i: (0, 0))],
            out_specs=pl.BlockSpec((tile_b, out_c), lambda i: (i, 0))),
        out_shape=jax.ShapeDtypeStruct((n_pad, out_c), jnp.float32),
        compiler_params=cp_parallel,
        cost_estimate=_cost(
            2 * n_pad * (in_c * h1_c + h1_c * h2_c + h2_c * out_c),
            4 * n_pad * (in_c + out_c)
            + 2 * (in_c * h1_c + h1_c * h2_c + h2_c * out_c)
            + 4 * (h1_c + h2_c + out_c)),
    )(x, w1s, shift1, w2s, shift2, w3, p["b3"])
    return out[:n]


# --------------------------------------------------------------------------- #
# Public wrapper
# --------------------------------------------------------------------------- #
def des_projector(x, params, *, tile_b=1024, single_block_max_n=None,
                  force_tiled=False):
    """x: (N, in_channel) f32.  params: dict from init_params.

    N <= single_block_max_n -> fully fused single-VMEM-block kernel (ceiling
    is generation-aware: ~4096 rows on 64 MiB-VMEM chips, ~8192 on 128 MiB).
    Larger N (or force_tiled) -> batch-tiled two-pass-BN structure: stats pass
    A, stats-only pass B, recompute-everything pass C; all passes are
    megacore-parallel with per-tile partial sums reduced in the wrapper.
    """
    n = x.shape[0]
    if single_block_max_n is None:
        single_block_max_n = (4096 if _vmem_capacity_bytes() <= (64 << 20)
                              else 8192)
    if force_tiled or n > single_block_max_n:
        return _des_projector_tiled(x, params, tile_b)
    return _des_projector_fused(x, params)


# --------------------------------------------------------------------------- #
# Params + pure-JAX reference
# --------------------------------------------------------------------------- #
def init_params(key, in_channel=16, out_channel=128):
    """PyTorch-style init: Linear U(-1/sqrt(fan_in), +1/sqrt(fan_in)); BN
    gamma=1, beta=0.  Linear weights stored pre-transposed as (in, out).
    b1/b2 are kept for the reference but are no-ops under training-mode BN."""
    dims = [(in_channel, 256), (256, 512), (512, out_channel)]
    keys = jax.random.split(key, 2 * len(dims))
    p = {}
    for i, (fan_in, fan_out) in enumerate(dims):
        bound = 1.0 / jnp.sqrt(jnp.float32(fan_in))
        p[f"w{i + 1}"] = jax.random.uniform(
            keys[2 * i], (fan_in, fan_out), minval=-bound, maxval=bound,
            dtype=jnp.float32)
        p[f"b{i + 1}"] = jax.random.uniform(
            keys[2 * i + 1], (1, fan_out), minval=-bound, maxval=bound,
            dtype=jnp.float32)
    p["g1"] = jnp.ones((1, 256), jnp.float32)
    p["be1"] = jnp.zeros((1, 256), jnp.float32)
    p["g2"] = jnp.ones((1, 512), jnp.float32)
    p["be2"] = jnp.zeros((1, 512), jnp.float32)
    return p


def des_projector_ref(x, p):
    """Pure-JAX f32 reference mirroring the PyTorch module (training-mode BN)."""
    def bn_relu(h, g, b):
        m = jnp.mean(h, axis=0, keepdims=True)
        v = jnp.mean((h - m) ** 2, axis=0, keepdims=True)
        return jnp.maximum((h - m) / jnp.sqrt(v + BN_EPS) * g + b, 0.0)

    h = bn_relu(x @ p["w1"] + p["b1"], p["g1"], p["be1"])
    h = bn_relu(h @ p["w2"] + p["b2"], p["g2"], p["be2"])
    return h @ p["w3"] + p["b3"]


# TODO(synk): BatchNorm running-stat buffer updates (a training-time side
# effect that does not affect the returned activation) are not emitted.

# --------------------------------------------------------------------------- #
if __name__ == "__main__":
    key = jax.random.PRNGKey(0)
    k_param, k_x1, k_x2 = jax.random.split(key, 3)

    IN_C, OUT_C = 16, 128
    params = init_params(k_param, in_channel=IN_C, out_channel=OUT_C)

    # bf16 MXU operands vs f32 reference -> bf16-appropriate tolerance.
    ATOL = RTOL = 3e-2

    # 1) Small batch: single-block fused kernel.
    x_small = jax.random.normal(k_x1, (8, IN_C), dtype=jnp.float32)
    out_small = jax.block_until_ready(des_projector(x_small, params))
    ref_small = des_projector_ref(x_small, params)
    assert out_small.shape == (8, OUT_C), out_small.shape
    assert jnp.allclose(out_small, ref_small, atol=ATOL, rtol=RTOL), (
        "fused mismatch, max abs err = "
        f"{float(jnp.max(jnp.abs(out_small - ref_small)))}")

    # 2) Batch-tiled two-pass-BN path.  N=300 with tile_b=256 gives 2 tiles,
    #    so it exercises padding, the pass-B row mask, the per-tile partial-sum
    #    reduction, and the folded-scale passes B/C.
    x_big = jax.random.normal(k_x2, (300, IN_C), dtype=jnp.float32)
    out_big = jax.block_until_ready(
        des_projector(x_big, params, force_tiled=True, tile_b=256))
    ref_big = des_projector_ref(x_big, params)
    assert out_big.shape == (300, OUT_C), out_big.shape
    assert jnp.allclose(out_big, ref_big, atol=ATOL, rtol=RTOL), (
        "tiled mismatch, max abs err = "
        f"{float(jnp.max(jnp.abs(out_big - ref_big)))}")

    print("KERNEL_OK")
</pallas_src>

<mosaic_0001>
module attributes {stable_mosaic.version = 11 : i64} {
  func.func @_fused_kernel(%arg0: memref<8x16xf32, #tpu.memory_space<vmem>>, %arg1: memref<16x256xbf16, #tpu.memory_space<vmem>>, %arg2: memref<1x256xf32, #tpu.memory_space<vmem>>, %arg3: memref<1x256xf32, #tpu.memory_space<vmem>>, %arg4: memref<256x512xbf16, #tpu.memory_space<vmem>>, %arg5: memref<1x512xf32, #tpu.memory_space<vmem>>, %arg6: memref<1x512xf32, #tpu.memory_space<vmem>>, %arg7: memref<512x128xbf16, #tpu.memory_space<vmem>>, %arg8: memref<1x128xf32, #tpu.memory_space<vmem>>, %arg9: memref<8x128xf32, #tpu.memory_space<vmem>>) attributes {dimension_semantics = [], scalar_prefetch = 0 : i64, scratch_operands = 0 : i64, tpu.core_type = #tpu.core_type<tc>} {
    %c0 = arith.constant 0 : index
    %c0_0 = arith.constant 0 : index
    %0 = vector.load %arg0[%c0, %c0_0] : memref<8x16xf32, #tpu.memory_space<vmem>>, vector<8x16xf32>
    %1 = arith.truncf %0 : vector<8x16xf32> to vector<8x16xbf16>
    %c0_1 = arith.constant 0 : index
    %c0_2 = arith.constant 0 : index
    %2 = vector.load %arg1[%c0_1, %c0_2] : memref<16x256xbf16, #tpu.memory_space<vmem>>, vector<16x256xbf16>
    %cst = arith.constant dense<0.000000e+00> : vector<8x256xf32>
    %3 = tpu.matmul %1, %2, %cst {dimension_numbers = #tpu.dot_dimension_numbers<[1], [0], [0], [1], [0, 0, 1, 1], [], []>} : vector<8x16xbf16>, vector<16x256xbf16>, vector<8x256xf32> -> vector<8x256xf32>
    %c0_3 = arith.constant 0 : index
    %c0_4 = arith.constant 0 : index
    %4 = vector.load %arg2[%c0_3, %c0_4] : memref<1x256xf32, #tpu.memory_space<vmem>>, vector<1x256xf32>
    %c0_5 = arith.constant 0 : index
    %c0_6 = arith.constant 0 : index
    %5 = vector.load %arg3[%c0_5, %c0_6] : memref<1x256xf32, #tpu.memory_space<vmem>>, vector<1x256xf32>
    %cst_7 = arith.constant dense<0.000000e+00> : vector<256xf32>
    %6 = vector.multi_reduction <add>, %3, %cst_7 [0] : vector<8x256xf32> to vector<256xf32>
    %7 = vector.shape_cast %6 : vector<256xf32> to vector<1x256xf32>
    %8 = arith.mulf %3, %3 : vector<8x256xf32>
    %cst_8 = arith.constant dense<0.000000e+00> : vector<256xf32>
    %9 = vector.multi_reduction <add>, %8, %cst_8 [0] : vector<8x256xf32> to vector<256xf32>
    %10 = vector.shape_cast %9 : vector<256xf32> to vector<1x256xf32>
    %cst_9 = arith.constant 1.250000e-01 : f32
    %11 = vector.broadcast %cst_9 : f32 to vector<1x256xf32>
    %12 = arith.mulf %7, %11 : vector<1x256xf32>
    %cst_10 = arith.constant 1.250000e-01 : f32
    %13 = vector.broadcast %cst_10 : f32 to vector<1x256xf32>
    %14 = arith.mulf %10, %13 : vector<1x256xf32>
    %15 = arith.mulf %12, %12 : vector<1x256xf32>
    %16 = arith.subf %14, %15 : vector<1x256xf32>
    %cst_11 = arith.constant 0.000000e+00 : f32
    %17 = vector.broadcast %cst_11 : f32 to vector<1x256xf32>
    %18 = arith.maximumf %16, %17 : vector<1x256xf32>
    %cst_12 = arith.constant 9.99999974E-6 : f32
    %19 = vector.broadcast %cst_12 : f32 to vector<1x256xf32>
    %20 = arith.addf %18, %19 : vector<1x256xf32>
    %21 = math.rsqrt %20 : vector<1x256xf32>
    %22 = arith.mulf %4, %21 : vector<1x256xf32>
    %23 = arith.mulf %12, %22 : vector<1x256xf32>
    %24 = arith.subf %5, %23 : vector<1x256xf32>
    %25 = vector.broadcast %22 : vector<1x256xf32> to vector<8x256xf32>
    %26 = arith.mulf %3, %25 : vector<8x256xf32>
    %27 = vector.broadcast %24 : vector<1x256xf32> to vector<8x256xf32>
    %28 = arith.addf %26, %27 : vector<8x256xf32>
    %cst_13 = arith.constant 0.000000e+00 : f32
    %29 = vector.broadcast %cst_13 : f32 to vector<8x256xf32>
    %30 = arith.maximumf %28, %29 : vector<8x256xf32>
    %31 = arith.truncf %30 : vector<8x256xf32> to vector<8x256xbf16>
    %c0_14 = arith.constant 0 : index
    %c0_15 = arith.constant 0 : index
    %32 = vector.load %arg4[%c0_14, %c0_15] : memref<256x512xbf16, #tpu.memory_space<vmem>>, vector<256x512xbf16>
    %cst_16 = arith.constant dense<0.000000e+00> : vector<8x512xf32>
    %33 = tpu.matmul %31, %32, %cst_16 {dimension_numbers = #tpu.dot_dimension_numbers<[1], [0], [0], [1], [0, 0, 1, 1], [], []>} : vector<8x256xbf16>, vector<256x512xbf16>, vector<8x512xf32> -> vector<8x512xf32>
    %c0_17 = arith.constant 0 : index
    %c0_18 = arith.constant 0 : index
    %34 = vector.load %arg5[%c0_17, %c0_18] : memref<1x512xf32, #tpu.memory_space<vmem>>, vector<1x512xf32>
    %c0_19 = arith.constant 0 : index
    %c0_20 = arith.constant 0 : index
    %35 = vector.load %arg6[%c0_19, %c0_20] : memref<1x512xf32, #tpu.memory_space<vmem>>, vector<1x512xf32>
    %cst_21 = arith.constant dense<0.000000e+00> : vector<512xf32>
    %36 = vector.multi_reduction <add>, %33, %cst_21 [0] : vector<8x512xf32> to vector<512xf32>
    %37 = vector.shape_cast %36 : vector<512xf32> to vector<1x512xf32>
    %38 = arith.mulf %33, %33 : vector<8x512xf32>
    %cst_22 = arith.constant dense<0.000000e+00> : vector<512xf32>
    %39 = vector.multi_reduction <add>, %38, %cst_22 [0] : vector<8x512xf32> to vector<512xf32>
    %40 = vector.shape_cast %39 : vector<512xf32> to vector<1x512xf32>
    %cst_23 = arith.constant 1.250000e-01 : f32
    %41 = vector.broadcast %cst_23 : f32 to vector<1x512xf32>
    %42 = arith.mulf %37, %41 : vector<1x512xf32>
    %cst_24 = arith.constant 1.250000e-01 : f32
    %43 = vector.broadcast %cst_24 : f32 to vector<1x512xf32>
    %44 = arith.mulf %40, %43 : vector<1x512xf32>
    %45 = arith.mulf %42, %42 : vector<1x512xf32>
    %46 = arith.subf %44, %45 : vector<1x512xf32>
    %cst_25 = arith.constant 0.000000e+00 : f32
    %47 = vector.broadcast %cst_25 : f32 to vector<1x512xf32>
    %48 = arith.maximumf %46, %47 : vector<1x512xf32>
    %cst_26 = arith.constant 9.99999974E-6 : f32
    %49 = vector.broadcast %cst_26 : f32 to vector<1x512xf32>
    %50 = arith.addf %48, %49 : vector<1x512xf32>
    %51 = math.rsqrt %50 : vector<1x512xf32>
    %52 = arith.mulf %34, %51 : vector<1x512xf32>
    %53 = arith.mulf %42, %52 : vector<1x512xf32>
    %54 = arith.subf %35, %53 : vector<1x512xf32>
    %55 = vector.broadcast %52 : vector<1x512xf32> to vector<8x512xf32>
    %56 = arith.mulf %33, %55 : vector<8x512xf32>
    %57 = vector.broadcast %54 : vector<1x512xf32> to vector<8x512xf32>
    %58 = arith.addf %56, %57 : vector<8x512xf32>
    %cst_27 = arith.constant 0.000000e+00 : f32
    %59 = vector.broadcast %cst_27 : f32 to vector<8x512xf32>
    %60 = arith.maximumf %58, %59 : vector<8x512xf32>
    %61 = arith.truncf %60 : vector<8x512xf32> to vector<8x512xbf16>
    %c0_28 = arith.constant 0 : index
    %c0_29 = arith.constant 0 : index
    %62 = vector.load %arg7[%c0_28, %c0_29] : memref<512x128xbf16, #tpu.memory_space<vmem>>, vector<512x128xbf16>
    %cst_30 = arith.constant dense<0.000000e+00> : vector<8x128xf32>
    %63 = tpu.matmul %61, %62, %cst_30 {dimension_numbers = #tpu.dot_dimension_numbers<[1], [0], [0], [1], [0, 0, 1, 1], [], []>} : vector<8x512xbf16>, vector<512x128xbf16>, vector<8x128xf32> -> vector<8x128xf32>
    %c0_31 = arith.constant 0 : index
    %c0_32 = arith.constant 0 : index
    %64 = vector.load %arg8[%c0_31, %c0_32] : memref<1x128xf32, #tpu.memory_space<vmem>>, vector<1x128xf32>
    %65 = vector.broadcast %64 : vector<1x128xf32> to vector<8x128xf32>
    %66 = arith.addf %63, %65 : vector<8x128xf32>
    %c0_33 = arith.constant 0 : index
    %c0_34 = arith.constant 0 : index
    %67 = vector.load %arg9[%c0_33, %c0_34] : memref<8x128xf32, #tpu.memory_space<vmem>>, vector<8x128xf32>
    tpu.vector_store %arg9[%c0_33, %c0_34], %66 {strides = array<i32>} : memref<8x128xf32, #tpu.memory_space<vmem>>, vector<8x128xf32>,
    return
  }
}

</mosaic_0001>

<llo_original>
// kernel: tpu_custom_call.1
$region0: #{tpu_custom_call.1}
  #allocation0 [shape = 'u32[]', space=smem, size = 0x4, offset = 0x4, fixed_abs, tag = 'smem constant byte address 0x4 - core index']
  #allocation1 [shape = 'u32[144,128]{1,0:T(1,128)}', space=vmem, size = 0x12000, scoped, tag = 'internal scratch']
  %s0 = inlined_call_operand.hbm [shape: f32[8,16], index: 0, kind: input, shape index: {}]
  %s1 = inlined_call_operand.hbm [shape: bf16[16,256], index: 1, kind: input, shape index: {}]
  %s2 = inlined_call_operand.hbm [shape: f32[1,256], index: 2, kind: input, shape index: {}]
  %s3 = inlined_call_operand.hbm [shape: f32[1,256], index: 3, kind: input, shape index: {}]
  %s4 = inlined_call_operand.hbm [shape: bf16[256,512], index: 4, kind: input, shape index: {}]
  %s5 = inlined_call_operand.vmem [shape: f32[1,512], index: 5, kind: input, shape index: {}]
  %s6 = inlined_call_operand.vmem [shape: f32[1,512], index: 6, kind: input, shape index: {}]
  %s7 = inlined_call_operand.hbm [shape: bf16[512,128], index: 7, kind: input, shape index: {}]
  %s8 = inlined_call_operand.vmem [shape: f32[1,128], index: 8, kind: input, shape index: {}]
  %s9 = inlined_call_operand.hbm [shape: f32[8,128], index: 9, kind: output, shape index: {}]
  %s10 = sld [smem:[#allocation0]]
  $region70: #{tpu_custom_call.1} parent=0
    _
  %s12 = ssub.s32 1, %s10
  %s13 = scalar_select 0, %s12, %s10
  $region1: #{tpu_custom_call.1} parent=0
    #allocation2 [shape = 'u8[4096]{0}', space=vmem, size = 0x1000, scoped, tag = 'input window, operand 0, single buffered']
    #allocation3 [shape = 's32[1]{0}', space=sflag, size = 0x4, scoped, tag = 'scoped memory for tpu_custom_call.1']
    #allocation4 [shape = 's32[1]{0}', space=sflag, size = 0x4, scoped, tag = 'scoped memory for tpu_custom_call.1']
    #allocation5 [shape = 'u8[8192]{0}', space=vmem, size = 0x2000, scoped, tag = 'input window, operand 1, single buffered']
    #allocation6 [shape = 's32[1]{0}', space=sflag, size = 0x4, scoped, tag = 'scoped memory for tpu_custom_call.1']
    #allocation7 [shape = 'u8[1024]{0}', space=vmem, size = 0x400, scoped, tag = 'input window, operand 2, single buffered']
    #allocation8 [shape = 'u8[1024]{0}', space=vmem, size = 0x400, scoped, tag = 'input window, operand 3, single buffered']
    #allocation9 [shape = 's32[1]{0}', space=sflag, size = 0x4, scoped, tag = 'scoped memory for tpu_custom_call.1']
    #allocation10 [shape = 'u8[262144]{0}', space=vmem, size = 0x40000, scoped, tag = 'input window, operand 4, single buffered']
    #allocation11 [shape = 'u8[131072]{0}', space=vmem, size = 0x20000, scoped, tag = 'input window, operand 7, single buffered']
    #allocation12 [shape = 's32[1]{0}', space=sflag, size = 0x4, scoped, tag = 'scoped memory for tpu_custom_call.1']
    #allocation13 [shape = 'u8[4096]{0}', space=vmem, size = 0x1000, scoped, tag = 'output window, operand 0, single buffered']
    %14 = vsyncpa [#allocation3], 0
    %15 = vsyncpa [#allocation6], 0
    %16 = vsyncpa [#allocation9], 0
    %17 = vsyncpa [#allocation12], 0
    %18 = vsyncpa [#allocation4], 0
    // Predicated region
    $region2: #{tpu_custom_call.1} parent=1 // pred_check
      _
    $region3: #{tpu_custom_call.1} parent=1 // pred_check_branch
      %20 = sbr.rel (0) target = $region5
    $region4: #{tpu_custom_call.1} parent=1 // pred_region
      %s22 = ssub.s32 128, 128
      %23 = vsyncadd [#allocation3], %s22
      %s25 = sshll.u32 [#allocation2], 4
      %s26 = int_to_ptr.vmem [resolvable:$true] %s25
      %28 = dma.hbm_to_vmem [thread:$0]  %s0, 128, %s26, [#allocation3]
    $region5: #{tpu_custom_call.1} parent=1 // pred_fallthru
      _
    // Predicated region
    $region6: #{tpu_custom_call.1} parent=1 // pred_check
      _
    $region7: #{tpu_custom_call.1} parent=1 // pred_check_branch
      %30 = sbr.rel (0) target = $region9
    $region8: #{tpu_custom_call.1} parent=1 // pred_region
      %s32 = ssub.s32 256, 256
      %33 = vsyncadd [#allocation6], %s32
      %s34 = sshll.u32 [#allocation5], 4
      %s35 = int_to_ptr.vmem [resolvable:$true] %s34
      %40 = dma.hbm_to_vmem [thread:$0]  %s1, 256, %s35, [#allocation6], 128, 128, 8
    $region9: #{tpu_custom_call.1} parent=1 // pred_fallthru
      _
    // Predicated region
    $region10: #{tpu_custom_call.1} parent=1 // pred_check
      _
    $region11: #{tpu_custom_call.1} parent=1 // pred_check_branch
      %42 = sbr.rel (0) target = $region13
    $region12: #{tpu_custom_call.1} parent=1 // pred_region
      %s44 = ssub.s32 32, 32
      %45 = vsyncadd [#allocation6], %s44
      %s47 = sshll.u32 [#allocation7], 4
      %s48 = int_to_ptr.vmem [resolvable:$true] %s47
      %50 = dma.hbm_to_vmem [thread:$0]  %s2, 32, %s48, [#allocation6]
    $region13: #{tpu_custom_call.1} parent=1 // pred_fallthru
      _
    // Predicated region
    $region14: #{tpu_custom_call.1} parent=1 // pred_check
      _
    $region15: #{tpu_custom_call.1} parent=1 // pred_check_branch
      %52 = sbr.rel (0) target = $region17
    $region16: #{tpu_custom_call.1} parent=1 // pred_region
      %s54 = ssub.s32 32, 32
      %55 = vsyncadd [#allocation9], %s54
      %s57 = sshll.u32 [#allocation8], 4
      %s58 = int_to_ptr.vmem [resolvable:$true] %s57
      %60 = dma.hbm_to_vmem [thread:$0]  %s3, 32, %s58, [#allocation9]
    $region17: #{tpu_custom_call.1} parent=1 // pred_fallthru
      _
    // Predicated region
    $region18: #{tpu_custom_call.1} parent=1 // pred_check
      _
    $region19: #{tpu_custom_call.1} parent=1 // pred_check_branch
      %62 = sbr.rel (0) target = $region21
    $region20: #{tpu_custom_call.1} parent=1 // pred_region
      %s64 = ssub.s32 8192, 8192
      %65 = vsyncadd [#allocation9], %s64
      %s66 = sshll.u32 [#allocation10], 4
      %s67 = int_to_ptr.vmem [resolvable:$true] %s66
      %72 = dma.hbm_to_vmem [thread:$0]  %s4, 8192, %s67, [#allocation9], 256, 256, 16
    $region21: #{tpu_custom_call.1} parent=1 // pred_fallthru
      _
    // Predicated region
    $region22: #{tpu_custom_call.1} parent=1 // pred_check
      _
    $region23: #{tpu_custom_call.1} parent=1 // pred_check_branch
      %74 = sbr.rel (0) target = $region25
    $region24: #{tpu_custom_call.1} parent=1 // pred_region
      _
    $region25: #{tpu_custom_call.1} parent=1 // pred_fallthru
      _
    // Predicated region
    $region26: #{tpu_custom_call.1} parent=1 // pred_check
      _
    $region27: #{tpu_custom_call.1} parent=1 // pred_check_branch
      %76 = sbr.rel (0) target = $region29
    $region28: #{tpu_custom_call.1} parent=1 // pred_region
      _
    $region29: #{tpu_custom_call.1} parent=1 // pred_fallthru
      _
    // Predicated region
    $region30: #{tpu_custom_call.1} parent=1 // pred_check
      _
    $region31: #{tpu_custom_call.1} parent=1 // pred_check_branch
      %78 = sbr.rel (0) target = $region33
    $region32: #{tpu_custom_call.1} parent=1 // pred_region
      %s80 = ssub.s32 4096, 4096
      %81 = vsyncadd [#allocation12], %s80
      %s82 = sshll.u32 [#allocation11], 4
      %s83 = int_to_ptr.vmem [resolvable:$true] %s82
      %88 = dma.hbm_to_vmem [thread:$0]  %s7, 4096, %s83, [#allocation12], 64, 64, 4
    $region33: #{tpu_custom_call.1} parent=1 // pred_fallthru
      _
    // Predicated region
    $region34: #{tpu_custom_call.1} parent=1 // pred_check
      _
    $region35: #{tpu_custom_call.1} parent=1 // pred_check_branch
      %90 = sbr.rel (0) target = $region37
    $region36: #{tpu_custom_call.1} parent=1 // pred_region
      _
    $region37: #{tpu_custom_call.1} parent=1 // pred_fallthru
      _
    // Predicated region
    $region38: #{tpu_custom_call.1} parent=1 // pred_check
      _
    $region39: #{tpu_custom_call.1} parent=1 // pred_check_branch
      %92 = sbr.rel (0) target = $region41
    $region40: #{tpu_custom_call.1} parent=1 // pred_region
      %93 = dma.done [#allocation3], 128
    $region41: #{tpu_custom_call.1} parent=1 // pred_fallthru
      _
    // Predicated region
    $region42: #{tpu_custom_call.1} parent=1 // pred_check
      _
    $region43: #{tpu_custom_call.1} parent=1 // pred_check_branch
      %95 = sbr.rel (0) target = $region45
    $region44: #{tpu_custom_call.1} parent=1 // pred_region
      %96 = dma.done [#allocation6], 256
    $region45: #{tpu_custom_call.1} parent=1 // pred_fallthru
      _
    // Predicated region
    $region46: #{tpu_custom_call.1} parent=1 // pred_check
      _
    $region47: #{tpu_custom_call.1} parent=1 // pred_check_branch
      %98 = sbr.rel (0) target = $region49
    $region48: #{tpu_custom_call.1} parent=1 // pred_region
      %99 = dma.done [#allocation6], 32
    $region49: #{tpu_custom_call.1} parent=1 // pred_fallthru
      _
    // Predicated region
    $region50: #{tpu_custom_call.1} parent=1 // pred_check
      _
    $region51: #{tpu_custom_call.1} parent=1 // pred_check_branch
      %101 = sbr.rel (0) target = $region53
    $region52: #{tpu_custom_call.1} parent=1 // pred_region
      %102 = dma.done [#allocation9], 32
    $region53: #{tpu_custom_call.1} parent=1 // pred_fallthru
      _
    // Predicated region
    $region54: #{tpu_custom_call.1} parent=1 // pred_check
      _
    $region55: #{tpu_custom_call.1} parent=1 // pred_check_branch
      %104 = sbr.rel (0) target = $region57
    $region56: #{tpu_custom_call.1} parent=1 // pred_region
      %105 = dma.done [#allocation9], 8192
    $region57: #{tpu_custom_call.1} parent=1 // pred_fallthru
      _
    // Predicated region
    $region58: #{tpu_custom_call.1} parent=1 // pred_check
      _
    $region59: #{tpu_custom_call.1} parent=1 // pred_check_branch
      %107 = sbr.rel (0) target = $region61
    $region60: #{tpu_custom_call.1} parent=1 // pred_region
      %108 = dma.done [#allocation12], 4096
    $region61: #{tpu_custom_call.1} parent=1 // pred_fallthru
      _
    %v110 = vld [vmem:[#allocation2] sm:$0xff]
    %v111 = vpack.c.bf16 %v110, %v110
    %v112 = vld [vmem:[#allocation5] sm:$0xff]
    %v113 = vld [vmem:[#allocation5 + $0x8] sm:$0xff]
    %v116 = vunpack.c.l.b16 %v112
    %v117 = vunpack.c.h.b16 %v112
    %v118 = vunpack.c.l.b16 %v113
    %v119 = vunpack.c.h.b16 %v113
    %v120 = vpack.c.b16 %v118, %v116
    %v121 = vpack.c.b16 %v119, %v117
    %vm124 = vcmask 130048
    %v126 = vsel %vm124, %v111, 0
    %128 = vmatprep.subr.bf16.mxu0 0
    %129 = vmatpush1.bf16.msra.mxu0 0
    %130 = vmatprep.subr.bf16.mxu0 0
    %131 = vmatpush1.bf16.msra.mxu0 0
    %132 = vmatprep.subr.bf16.mxu0 0
    %133 = vmatpush1.bf16.msra.mxu0 0
    %134 = vmatprep.subr.bf16.mxu0 0
    %135 = vmatpush1.bf16.msra.mxu0 0
    %136 = vmatprep.subr.bf16.mxu0 0
    %137 = vmatpush1.bf16.msra.mxu0 0
    %138 = vmatprep.subr.bf16.mxu0 0
    %139 = vmatpush1.bf16.msra.mxu0 0
    %140 = vmatprep.subr.bf16.mxu0 0
    %141 = vmatpush1.bf16.msra.mxu0 0
    %142 = vmatprep.subr.bf16.mxu0 %v121
    %143 = vmatpush1.bf16.msra.mxu0 %v120
    %144 = vmatprep.subr.bf16.mxu0 0
    %145 = vmatpush2.bf16.msra.mxu0 0
    %146 = vmatprep.subr.bf16.mxu0 0
    %147 = vmatpush2.bf16.msra.mxu0 0
    %148 = vmatprep.subr.bf16.mxu0 0
    %149 = vmatpush2.bf16.msra.mxu0 0
    %150 = vmatprep.subr.bf16.mxu0 0
    %151 = vmatpush2.bf16.msra.mxu0 0
    %152 = vmatprep.subr.bf16.mxu0 0
    %153 = vmatpush2.bf16.msra.mxu0 0
    %154 = vmatprep.subr.bf16.mxu0 0
    %155 = vmatpush2.bf16.msra.mxu0 0
    %156 = vmatprep.subr.bf16.mxu0 0
    %157 = vmatpush2.bf16.msra.mxu0 0
    %158 = vmatprep.subr.bf16.mxu0 0
    %159 = vmatpush2.bf16.msra.mxu0 0
    %160 = vmatprep.mubr.bf16.mxu0 0
    %161 = vmatmul.mubr.bf16.gmra.mxu0 %v126
    %v162 = vpop.f32.mrf.mxu0
    %v163 = vadd.f32 0.0, %v162
    %v164 = vpop.f32.mrf.mxu0
    %v165 = vadd.f32 0.0, %v164
    %v166 = vpop.f32.mrf.mxu0
    %v167 = vpop.f32.mrf.mxu0
    %168 = vdwg.mxu0
    %v169 = vld [vmem:[#allocation7] sm:$0x3]
    %v170 = vld [vmem:[#allocation8] sm:$0x3]
    %v171 = vrot.slane %v163, 4
    %v172 = vadd.f32 %v163, %v171
    %v173 = vrot.slane %v172, 2
    %v174 = vadd.f32 %v172, %v173
    %v175 = vrot.slane %v174, 1
    %v176 = vadd.f32 %v174, %v175
    %v177 = vrot.slane %v165, 4
    %v178 = vadd.f32 %v165, %v177
    %v179 = vrot.slane %v178, 2
    %v180 = vadd.f32 %v178, %v179
    %v181 = vrot.slane %v180, 1
    %v182 = vadd.f32 %v180, %v181
    %v183 = vmul.f32 %v163, %v163
    %v184 = vmul.f32 %v165, %v165
    %v185 = vrot.slane %v183, 4
    %v186 = vadd.f32 %v183, %v185
    %v187 = vrot.slane %v186, 2
    %v188 = vadd.f32 %v186, %v187
    %v189 = vrot.slane %v188, 1
    %v190 = vadd.f32 %v188, %v189
    %v191 = vrot.slane %v184, 4
    %v192 = vadd.f32 %v184, %v191
    %v193 = vrot.slane %v192, 2
    %v194 = vadd.f32 %v192, %v193
    %v195 = vrot.slane %v194, 1
    %v196 = vadd.f32 %v194, %v195
    %v197 = vmul.f32 %v176, 0.125
    %v198 = vmul.f32 %v182, 0.125
    %v199 = vmul.f32 %v190, 0.125
    %v200 = vmul.f32 %v196, 0.125
    %v201 = vmul.f32 %v197, %v197
    %v202 = vmul.f32 %v198, %v198
    %v203 = vsub.f32 %v199, %v201
    %v204 = vsub.f32 %v200, %v202
    %v205 = vmax.f32 %v203, 0.0
    %v206 = vmax.f32 %v204, 0.0
    %v207 = vadd.f32 %v205, 1e-05
    %v208 = vadd.f32 %v206, 1e-05
    %v209 = vrsqrt.pop %v207
    %v210 = vrsqrt.pop %v208
    %v213 = vcombine.low %v209, %v210
    %v215 = vunpack.c.l.s4 1966171168
    %v216 = vunpack.c.0.s8 %v215
    %v217 = vlaneseq
    %v218 = vshrl.u32 %v217, 7
    %v219 = vsub.s32 %v216, %v218
    %v220 = vrot.slane %v213, %v219
    %v222 = vunpack.c.l.s4 1966171168
    %v223 = vunpack.c.0.s8 %v222
    %v224 = vlaneseq
    %v225 = vshrl.u32 %v224, 7
    %v226 = vsub.s32 %v223, %v225
    %v227 = vrot.slane %v220, %v226
    %v229 = vmul.f32 %v169, %v227
    %v231 = vlaneseq
    %v232 = vshrl.u32 %v231, 7
    %v233 = vsub.s32 0, %v232
    %v234 = vrot.slane %v229, %v233
    %v235 = vlaneseq
    %v236 = vshrl.u32 %v235, 7
    %v237 = vsub.s32 1, %v236
    %v238 = vrot.slane %v229, %v237
    %v241 = vmul.f32 %v197, %v234
    %v242 = vmul.f32 %v198, %v238
    %v245 = vcombine.low %v241, %v242
    %v247 = vunpack.c.l.s4 1966171168
    %v248 = vunpack.c.0.s8 %v247
    %v249 = vlaneseq
    %v250 = vshrl.u32 %v249, 7
    %v251 = vsub.s32 %v248, %v250
    %v252 = vrot.slane %v245, %v251
    %v254 = vunpack.c.l.s4 1966171168
    %v255 = vunpack.c.0.s8 %v254
    %v256 = vlaneseq
    %v257 = vshrl.u32 %v256, 7
    %v258 = vsub.s32 %v255, %v257
    %v259 = vrot.slane %v252, %v258
    %v261 = vsub.f32 %v170, %v259
    %v262 = vmul.f32 %v163, %v234
    %v263 = vmul.f32 %v165, %v238
    %v265 = vlaneseq
    %v266 = vshrl.u32 %v265, 7
    %v267 = vsub.s32 0, %v266
    %v268 = vrot.slane %v261, %v267
    %v269 = vlaneseq
    %v270 = vshrl.u32 %v269, 7
    %v271 = vsub.s32 1, %v270
    %v272 = vrot.slane %v261, %v271
    %v275 = vadd.f32 %v262, %v268
    %v276 = vadd.f32 %v263, %v272
    %v277 = vmax.f32 %v275, 0.0
    %v278 = vmax.f32 %v276, 0.0
    %v279 = vpack.c.bf16 %v277, %v277
    %v280 = vpack.c.bf16 %v278, %v278
    %v281 = vld [vmem:[#allocation10] sm:$0xff]
    %v282 = vld [vmem:[#allocation10 + $0x8] sm:$0xff]
    %v283 = vld [vmem:[#allocation10 + $0x10] sm:$0xff]
    %v284 = vld [vmem:[#allocation10 + $0x18] sm:$0xff]
    %v285 = vld [vmem:[#allocation10 + $0x20] sm:$0xff]
    %v286 = vld [vmem:[#allocation10 + $0x28] sm:$0xff]
    %v287 = vld [vmem:[#allocation10 + $0x30] sm:$0xff]
    %v288 = vld [vmem:[#allocation10 + $0x38] sm:$0xff]
    %v289 = vld [vmem:[#allocation10 + $0x40] sm:$0xff]
    %v290 = vld [vmem:[#allocation10 + $0x48] sm:$0xff]
    %v291 = vld [vmem:[#allocation10 + $0x50] sm:$0xff]
    %v292 = vld [vmem:[#allocation10 + $0x58] sm:$0xff]
    %v293 = vld [vmem:[#allocation10 + $0x60] sm:$0xff]
    %v294 = vld [vmem:[#allocation10 + $0x68] sm:$0xff]
    %v295 = vld [vmem:[#allocation10 + $0x70] sm:$0xff]
    %v296 = vld [vmem:[#allocation10 + $0x78] sm:$0xff]
    %v297 = vld [vmem:[#allocation10 + $0x80] sm:$0xff]
    %v298 = vld [vmem:[#allocation10 + $0x88] sm:$0xff]
    %v299 = vld [vmem:[#allocation10 + $0x90] sm:$0xff]
    %v300 = vld [vmem:[#allocation10 + $0x98] sm:$0xff]
    %v301 = vld [vmem:[#allocation10 + $0xa0] sm:$0xff]
    %v302 = vld [vmem:[#allocation10 + $0xa8] sm:$0xff]
    %v303 = vld [vmem:[#allocation10 + $0xb0] sm:$0xff]
    %v304 = vld [vmem:[#allocation10 + $0xb8] sm:$0xff]
    %v305 = vld [vmem:[#allocation10 + $0xc0] sm:$0xff]
    %v306 = vld [vmem:[#allocation10 + $0xc8] sm:$0xff]
    %v307 = vld [vmem:[#allocation10 + $0xd0] sm:$0xff]
    %v308 = vld [vmem:[#allocation10 + $0xd8] sm:$0xff]
    %v309 = vld [vmem:[#allocation10 + $0xe0] sm:$0xff]
    %v310 = vld [vmem:[#allocation10 + $0xe8] sm:$0xff]
    %v311 = vld [vmem:[#allocation10 + $0xf0] sm:$0xff]
    %v312 = vld [vmem:[#allocation10 + $0xf8] sm:$0xff]
    %v313 = vld [vmem:[#allocation10 + $0x100] sm:$0xff]
    %v314 = vld [vmem:[#allocation10 + $0x108] sm:$0xff]
    %v315 = vld [vmem:[#allocation10 + $0x110] sm:$0xff]
    %v316 = vld [vmem:[#allocation10 + $0x118] sm:$0xff]
    %v317 = vld [vmem:[#allocation10 + $0x120] sm:$0xff]
    %v318 = vld [vmem:[#allocation10 + $0x128] sm:$0xff]
    %v319 = vld [vmem:[#allocation10 + $0x130] sm:$0xff]
    %v320 = vld [vmem:[#allocation10 + $0x138] sm:$0xff]
    %v321 = vld [vmem:[#allocation10 + $0x140] sm:$0xff]
    %v322 = vld [vmem:[#allocation10 + $0x148] sm:$0xff]
    %v323 = vld [vmem:[#allocation10 + $0x150] sm:$0xff]
    %v324 = vld [vmem:[#allocation10 + $0x158] sm:$0xff]
    %v325 = vld [vmem:[#allocation10 + $0x160] sm:$0xff]
    %v326 = vld [vmem:[#allocation10 + $0x168] sm:$0xff]
    %v327 = vld [vmem:[#allocation10 + $0x170] sm:$0xff]
    %v328 = vld [vmem:[#allocation10 + $0x178] sm:$0xff]
    %v329 = vld [vmem:[#allocation10 + $0x180] sm:$0xff]
    %v330 = vld [vmem:[#allocation10 + $0x188] sm:$0xff]
    %v331 = vld [vmem:[#allocation10 + $0x190] sm:$0xff]
    %v332 = vld [vmem:[#allocation10 + $0x198] sm:$0xff]
    %v333 = vld [vmem:[#allocation10 + $0x1a0] sm:$0xff]
    %v334 = vld [vmem:[#allocation10 + $0x1a8] sm:$0xff]
    %v335 = vld [vmem:[#allocation10 + $0x1b0] sm:$0xff]
    %v336 = vld [vmem:[#allocation10 + $0x1b8] sm:$0xff]
    %v337 = vld [vmem:[#allocation10 + $0x1c0] sm:$0xff]
    %v338 = vld [vmem:[#allocation10 + $0x1c8] sm:$0xff]
    %v339 = vld [vmem:[#allocation10 + $0x1d0] sm:$0xff]
    %v340 = vld [vmem:[#allocation10 + $0x1d8] sm:$0xff]
    %v341 = vld [vmem:[#allocation10 + $0x1e0] sm:$0xff]
    %v342 = vld [vmem:[#allocation10 + $0x1e8] sm:$0xff]
    %v343 = vld [vmem:[#allocation10 + $0x1f0] sm:$0xff]
    %v344 = vld [vmem:[#allocation10 + $0x1f8] sm:$0xff]
    %v409 = vunpack.c.l.b16 %v281
    %v410 = vunpack.c.h.b16 %v281
    %v411 = vunpack.c.l.b16 %v282
    %v412 = vunpack.c.h.b16 %v282
    %v413 = vunpack.c.l.b16 %v283
    %v414 = vunpack.c.h.b16 %v283
    %v415 = vunpack.c.l.b16 %v284
    %v416 = vunpack.c.h.b16 %v284
    %v417 = vunpack.c.l.b16 %v285
    %v418 = vunpack.c.h.b16 %v285
    %v419 = vunpack.c.l.b16 %v286
    %v420 = vunpack.c.h.b16 %v286
    %v421 = vunpack.c.l.b16 %v287
    %v422 = vunpack.c.h.b16 %v287
    %v423 = vunpack.c.l.b16 %v288
    %v424 = vunpack.c.h.b16 %v288
    %v425 = vunpack.c.l.b16 %v289
    %v426 = vunpack.c.h.b16 %v289
    %v427 = vunpack.c.l.b16 %v290
    %v428 = vunpack.c.h.b16 %v290
    %v429 = vunpack.c.l.b16 %v291
    %v430 = vunpack.c.h.b16 %v291
    %v431 = vunpack.c.l.b16 %v292
    %v432 = vunpack.c.h.b16 %v292
    %v433 = vunpack.c.l.b16 %v293
    %v434 = vunpack.c.h.b16 %v293
    %v435 = vunpack.c.l.b16 %v294
    %v436 = vunpack.c.h.b16 %v294
    %v437 = vunpack.c.l.b16 %v295
    %v438 = vunpack.c.h.b16 %v295
    %v439 = vunpack.c.l.b16 %v296
    %v440 = vunpack.c.h.b16 %v296
    %v441 = vunpack.c.l.b16 %v297
    %v442 = vunpack.c.h.b16 %v297
    %v443 = vunpack.c.l.b16 %v298
    %v444 = vunpack.c.h.b16 %v298
    %v445 = vunpack.c.l.b16 %v299
    %v446 = vunpack.c.h.b16 %v299
    %v447 = vunpack.c.l.b16 %v300
    %v448 = vunpack.c.h.b16 %v300
    %v449 = vunpack.c.l.b16 %v301
    %v450 = vunpack.c.h.b16 %v301
    %v451 = vunpack.c.l.b16 %v302
    %v452 = vunpack.c.h.b16 %v302
    %v453 = vunpack.c.l.b16 %v303
    %v454 = vunpack.c.h.b16 %v303
    %v455 = vunpack.c.l.b16 %v304
    %v456 = vunpack.c.h.b16 %v304
    %v457 = vunpack.c.l.b16 %v305
    %v458 = vunpack.c.h.b16 %v305
    %v459 = vunpack.c.l.b16 %v306
    %v460 = vunpack.c.h.b16 %v306
    %v461 = vunpack.c.l.b16 %v307
    %v462 = vunpack.c.h.b16 %v307
    %v463 = vunpack.c.l.b16 %v308
    %v464 = vunpack.c.h.b16 %v308
    %v465 = vunpack.c.l.b16 %v309
    %v466 = vunpack.c.h.b16 %v309
    %v467 = vunpack.c.l.b16 %v310
    %v468 = vunpack.c.h.b16 %v310
    %v469 = vunpack.c.l.b16 %v311
    %v470 = vunpack.c.h.b16 %v311
    %v471 = vunpack.c.l.b16 %v312
    %v472 = vunpack.c.h.b16 %v312
    %v473 = vunpack.c.l.b16 %v313
    %v474 = vunpack.c.h.b16 %v313
    %v475 = vunpack.c.l.b16 %v314
    %v476 = vunpack.c.h.b16 %v314
    %v477 = vunpack.c.l.b16 %v315
    %v478 = vunpack.c.h.b16 %v315
    %v479 = vunpack.c.l.b16 %v316
    %v480 = vunpack.c.h.b16 %v316
    %v481 = vunpack.c.l.b16 %v317
    %v482 = vunpack.c.h.b16 %v317
    %v483 = vunpack.c.l.b16 %v318
    %v484 = vunpack.c.h.b16 %v318
    %v485 = vunpack.c.l.b16 %v319
    %v486 = vunpack.c.h.b16 %v319
    %v487 = vunpack.c.l.b16 %v320
    %v488 = vunpack.c.h.b16 %v320
    %v489 = vunpack.c.l.b16 %v321
    %v490 = vunpack.c.h.b16 %v321
    %v491 = vunpack.c.l.b16 %v322
    %v492 = vunpack.c.h.b16 %v322
    %v493 = vunpack.c.l.b16 %v323
    %v494 = vunpack.c.h.b16 %v323
    %v495 = vunpack.c.l.b16 %v324
    %v496 = vunpack.c.h.b16 %v324
    %v497 = vunpack.c.l.b16 %v325
    %v498 = vunpack.c.h.b16 %v325
    %v499 = vunpack.c.l.b16 %v326
    %v500 = vunpack.c.h.b16 %v326
    %v501 = vunpack.c.l.b16 %v327
    %v502 = vunpack.c.h.b16 %v327
    %v503 = vunpack.c.l.b16 %v328
    %v504 = vunpack.c.h.b16 %v328
    %v505 = vunpack.c.l.b16 %v329
    %v506 = vunpack.c.h.b16 %v329
    %v507 = vunpack.c.l.b16 %v330
    %v508 = vunpack.c.h.b16 %v330
    %v509 = vunpack.c.l.b16 %v331
    %v510 = vunpack.c.h.b16 %v331
    %v511 = vunpack.c.l.b16 %v332
    %v512 = vunpack.c.h.b16 %v332
    %v513 = vunpack.c.l.b16 %v333
    %v514 = vunpack.c.h.b16 %v333
    %v515 = vunpack.c.l.b16 %v334
    %v516 = vunpack.c.h.b16 %v334
    %v517 = vunpack.c.l.b16 %v335
    %v518 = vunpack.c.h.b16 %v335
    %v519 = vunpack.c.l.b16 %v336
    %v520 = vunpack.c.h.b16 %v336
    %v521 = vunpack.c.l.b16 %v337
    %v522 = vunpack.c.h.b16 %v337
    %v523 = vunpack.c.l.b16 %v338
    %v524 = vunpack.c.h.b16 %v338
    %v525 = vunpack.c.l.b16 %v339
    %v526 = vunpack.c.h.b16 %v339
    %v527 = vunpack.c.l.b16 %v340
    %v528 = vunpack.c.h.b16 %v340
    %v529 = vunpack.c.l.b16 %v341
    %v530 = vunpack.c.h.b16 %v341
    %v531 = vunpack.c.l.b16 %v342
    %v532 = vunpack.c.h.b16 %v342
    %v533 = vunpack.c.l.b16 %v343
    %v534 = vunpack.c.h.b16 %v343
    %v535 = vunpack.c.l.b16 %v344
    %v536 = vunpack.c.h.b16 %v344
    %v537 = vpack.c.b16 %v413, %v409
    %v538 = vpack.c.b16 %v414, %v410
    %v539 = vpack.c.b16 %v415, %v411
    %v540 = vpack.c.b16 %v416, %v412
    %v541 = vpack.c.b16 %v421, %v417
    %v542 = vpack.c.b16 %v422, %v418
    %v543 = vpack.c.b16 %v423, %v419
    %v544 = vpack.c.b16 %v424, %v420
    %v545 = vpack.c.b16 %v429, %v425
    %v546 = vpack.c.b16 %v430, %v426
    %v547 = vpack.c.b16 %v431, %v427
    %v548 = vpack.c.b16 %v432, %v428
    %v549 = vpack.c.b16 %v437, %v433
    %v550 = vpack.c.b16 %v438, %v434
    %v551 = vpack.c.b16 %v439, %v435
    %v552 = vpack.c.b16 %v440, %v436
    %v553 = vpack.c.b16 %v445, %v441
    %v554 = vpack.c.b16 %v446, %v442
    %v555 = vpack.c.b16 %v447, %v443
    %v556 = vpack.c.b16 %v448, %v444
    %v557 = vpack.c.b16 %v453, %v449
    %v558 = vpack.c.b16 %v454, %v450
    %v559 = vpack.c.b16 %v455, %v451
    %v560 = vpack.c.b16 %v456, %v452
    %v561 = vpack.c.b16 %v461, %v457
    %v562 = vpack.c.b16 %v462, %v458
    %v563 = vpack.c.b16 %v463, %v459
    %v564 = vpack.c.b16 %v464, %v460
    %v565 = vpack.c.b16 %v469, %v465
    %v566 = vpack.c.b16 %v470, %v466
    %v567 = vpack.c.b16 %v471, %v467
    %v568 = vpack.c.b16 %v472, %v468
    %v569 = vpack.c.b16 %v477, %v473
    %v570 = vpack.c.b16 %v478, %v474
    %v571 = vpack.c.b16 %v479, %v475
    %v572 = vpack.c.b16 %v480, %v476
    %v573 = vpack.c.b16 %v485, %v481
    %v574 = vpack.c.b16 %v486, %v482
    %v575 = vpack.c.b16 %v487, %v483
    %v576 = vpack.c.b16 %v488, %v484
    %v577 = vpack.c.b16 %v493, %v489
    %v578 = vpack.c.b16 %v494, %v490
    %v579 = vpack.c.b16 %v495, %v491
    %v580 = vpack.c.b16 %v496, %v492
    %v581 = vpack.c.b16 %v501, %v497
    %v582 = vpack.c.b16 %v502, %v498
    %v583 = vpack.c.b16 %v503, %v499
    %v584 = vpack.c.b16 %v504, %v500
    %v585 = vpack.c.b16 %v509, %v505
    %v586 = vpack.c.b16 %v510, %v506
    %v587 = vpack.c.b16 %v511, %v507
    %v588 = vpack.c.b16 %v512, %v508
    %v589 = vpack.c.b16 %v517, %v513
    %v590 = vpack.c.b16 %v518, %v514
    %v591 = vpack.c.b16 %v519, %v515
    %v592 = vpack.c.b16 %v520, %v516
    %v593 = vpack.c.b16 %v525, %v521
    %v594 = vpack.c.b16 %v526, %v522
    %v595 = vpack.c.b16 %v527, %v523
    %v596 = vpack.c.b16 %v528, %v524
    %v597 = vpack.c.b16 %v533, %v529
    %v598 = vpack.c.b16 %v534, %v530
    %v599 = vpack.c.b16 %v535, %v531
    %v600 = vpack.c.b16 %v536, %v532
    %665 = vmatprep.subr.bf16.mxu0 %v566
    %666 = vmatpush1.bf16.msra.mxu0 %v565
    %667 = vmatprep.subr.bf16.mxu0 %v562
    %668 = vmatpush1.bf16.msra.mxu0 %v561
    %669 = vmatprep.subr.bf16.mxu0 %v558
    %670 = vmatpush1.bf16.msra.mxu0 %v557
    %671 = vmatprep.subr.bf16.mxu0 %v554
    %672 = vmatpush1.bf16.msra.mxu0 %v553
    %673 = vmatprep.subr.bf16.mxu0 %v550
    %674 = vmatpush1.bf16.msra.mxu0 %v549
    %675 = vmatprep.subr.bf16.mxu0 %v546
    %676 = vmatpush1.bf16.msra.mxu0 %v545
    %677 = vmatprep.subr.bf16.mxu0 %v542
    %678 = vmatpush1.bf16.msra.mxu0 %v541
    %679 = vmatprep.subr.bf16.mxu0 %v538
    %680 = vmatpush1.bf16.msra.mxu0 %v537
    %681 = vmatprep.subr.bf16.mxu0 %v598
    %682 = vmatpush2.bf16.msra.mxu0 %v597
    %683 = vmatprep.subr.bf16.mxu0 %v594
    %684 = vmatpush2.bf16.msra.mxu0 %v593
    %685 = vmatprep.subr.bf16.mxu0 %v590
    %686 = vmatpush2.bf16.msra.mxu0 %v589
    %687 = vmatprep.subr.bf16.mxu0 %v586
    %688 = vmatpush2.bf16.msra.mxu0 %v585
    %689 = vmatprep.subr.bf16.mxu0 %v582
    %690 = vmatpush2.bf16.msra.mxu0 %v581
    %691 = vmatprep.subr.bf16.mxu0 %v578
    %692 = vmatpush2.bf16.msra.mxu0 %v577
    %693 = vmatprep.subr.bf16.mxu0 %v574
    %694 = vmatpush2.bf16.msra.mxu0 %v573
    %695 = vmatprep.subr.bf16.mxu0 %v570
    %696 = vmatpush2.bf16.msra.mxu0 %v569
    %697 = vmatprep.mubr.bf16.mxu0 %v280
    %698 = vmatmul.mubr.bf16.gmra.mxu0 %v279
    %v699 = vpop.f32.mrf.mxu0
    %v700 = vadd.f32 0.0, %v699
    %v701 = vpop.f32.mrf.mxu0
    %v702 = vadd.f32 0.0, %v701
    %v703 = vpop.f32.mrf.mxu0
    %v704 = vpop.f32.mrf.mxu0
    %705 = vdwg.mxu0
    %706 = vmatprep.subr.bf16.mxu0 %v568
    %707 = vmatpush1.bf16.msra.mxu0 %v567
    %708 = vmatprep.subr.bf16.mxu0 %v564
    %709 = vmatpush1.bf16.msra.mxu0 %v563
    %710 = vmatprep.subr.bf16.mxu0 %v560
    %711 = vmatpush1.bf16.msra.mxu0 %v559
    %712 = vmatprep.subr.bf16.mxu0 %v556
    %713 = vmatpush1.bf16.msra.mxu0 %v555
    %714 = vmatprep.subr.bf16.mxu0 %v552
    %715 = vmatpush1.bf16.msra.mxu0 %v551
    %716 = vmatprep.subr.bf16.mxu0 %v548
    %717 = vmatpush1.bf16.msra.mxu0 %v547
    %718 = vmatprep.subr.bf16.mxu0 %v544
    %719 = vmatpush1.bf16.msra.mxu0 %v543
    %720 = vmatprep.subr.bf16.mxu0 %v540
    %721 = vmatpush1.bf16.msra.mxu0 %v539
    %722 = vmatprep.subr.bf16.mxu0 %v600
    %723 = vmatpush2.bf16.msra.mxu0 %v599
    %724 = vmatprep.subr.bf16.mxu0 %v596
    %725 = vmatpush2.bf16.msra.mxu0 %v595
    %726 = vmatprep.subr.bf16.mxu0 %v592
    %727 = vmatpush2.bf16.msra.mxu0 %v591
    %728 = vmatprep.subr.bf16.mxu0 %v588
    %729 = vmatpush2.bf16.msra.mxu0 %v587
    %730 = vmatprep.subr.bf16.mxu0 %v584
    %731 = vmatpush2.bf16.msra.mxu0 %v583
    %732 = vmatprep.subr.bf16.mxu0 %v580
    %733 = vmatpush2.bf16.msra.mxu0 %v579
    %734 = vmatprep.subr.bf16.mxu0 %v576
    %735 = vmatpush2.bf16.msra.mxu0 %v575
    %736 = vmatprep.subr.bf16.mxu0 %v572
    %737 = vmatpush2.bf16.msra.mxu0 %v571
    %738 = vmatprep.mubr.bf16.mxu0 %v280
    %739 = vmatmul.mubr.bf16.gmra.mxu0 %v279
    %v740 = vpop.f32.mrf.mxu0
    %v741 = vadd.f32 0.0, %v740
    %v742 = vpop.f32.mrf.mxu0
    %v743 = vadd.f32 0.0, %v742
    %v744 = vpop.f32.mrf.mxu0
    %v745 = vpop.f32.mrf.mxu0
    %746 = vdwg.mxu0
    %v747 = vld [vmem:[%s5] sm:$0xf]
    %v748 = vld [vmem:[%s6] sm:$0xf]
    %v749 = vrot.slane %v700, 4
    %v750 = vadd.f32 %v700, %v749
    %v751 = vrot.slane %v750, 2
    %v752 = vadd.f32 %v750, %v751
    %v753 = vrot.slane %v752, 1
    %v754 = vadd.f32 %v752, %v753
    %v755 = vrot.slane %v702, 4
    %v756 = vadd.f32 %v702, %v755
    %v757 = vrot.slane %v756, 2
    %v758 = vadd.f32 %v756, %v757
    %v759 = vrot.slane %v758, 1
    %v760 = vadd.f32 %v758, %v759
    %v761 = vrot.slane %v741, 4
    %v762 = vadd.f32 %v741, %v761
    %v763 = vrot.slane %v762, 2
    %v764 = vadd.f32 %v762, %v763
    %v765 = vrot.slane %v764, 1
    %v766 = vadd.f32 %v764, %v765
    %v767 = vrot.slane %v743, 4
    %v768 = vadd.f32 %v743, %v767
    %v769 = vrot.slane %v768, 2
    %v770 = vadd.f32 %v768, %v769
    %v771 = vrot.slane %v770, 1
    %v772 = vadd.f32 %v770, %v771
    %v773 = vmul.f32 %v700, %v700
    %v774 = vmul.f32 %v702, %v702
    %v775 = vmul.f32 %v741, %v741
    %v776 = vmul.f32 %v743, %v743
    %v777 = vrot.slane %v773, 4
    %v778 = vadd.f32 %v773, %v777
    %v779 = vrot.slane %v778, 2
    %v780 = vadd.f32 %v778, %v779
    %v781 = vrot.slane %v780, 1
    %v782 = vadd.f32 %v780, %v781
    %v783 = vrot.slane %v774, 4
    %v784 = vadd.f32 %v774, %v783
    %v785 = vrot.slane %v784, 2
    %v786 = vadd.f32 %v784, %v785
    %v787 = vrot.slane %v786, 1
    %v788 = vadd.f32 %v786, %v787
    %v789 = vrot.slane %v775, 4
    %v790 = vadd.f32 %v775, %v789
    %v791 = vrot.slane %v790, 2
    %v792 = vadd.f32 %v790, %v791
    %v793 = vrot.slane %v792, 1
    %v794 = vadd.f32 %v792, %v793
    %v795 = vrot.slane %v776, 4
    %v796 = vadd.f32 %v776, %v795
    %v797 = vrot.slane %v796, 2
    %v798 = vadd.f32 %v796, %v797
    %v799 = vrot.slane %v798, 1
    %v800 = vadd.f32 %v798, %v799
    %v801 = vmul.f32 %v754, 0.125
    %v802 = vmul.f32 %v760, 0.125
    %v803 = vmul.f32 %v766, 0.125
    %v804 = vmul.f32 %v772, 0.125
    %v805 = vmul.f32 %v782, 0.125
    %v806 = vmul.f32 %v788, 0.125
    %v807 = vmul.f32 %v794, 0.125
    %v808 = vmul.f32 %v800, 0.125
    %v809 = vmul.f32 %v801, %v801
    %v810 = vmul.f32 %v802, %v802
    %v811 = vmul.f32 %v803, %v803
    %v812 = vmul.f32 %v804, %v804
    %v813 = vsub.f32 %v805, %v809
    %v814 = vsub.f32 %v806, %v810
    %v815 = vsub.f32 %v807, %v811
    %v816 = vsub.f32 %v808, %v812
    %v817 = vmax.f32 %v813, 0.0
    %v818 = vmax.f32 %v814, 0.0
    %v819 = vmax.f32 %v815, 0.0
    %v820 = vmax.f32 %v816, 0.0
    %v821 = vadd.f32 %v817, 1e-05
    %v822 = vadd.f32 %v818, 1e-05
    %v823 = vadd.f32 %v819, 1e-05
    %v824 = vadd.f32 %v820, 1e-05
    %v825 = vrsqrt.pop %v821
    %v826 = vrsqrt.pop %v822
    %v827 = vrsqrt.pop %v823
    %v828 = vrsqrt.pop %v824
    %v833 = vcombine.low %v825, %v826
    %v834 = vcombine.low %v827, %v828
    %v836 = vunpack.c.l.s4 1966171168
    %v837 = vunpack.c.0.s8 %v836
    %v838 = vlaneseq
    %v839 = vshrl.u32 %v838, 7
    %v840 = vsub.s32 %v837, %v839
    %v841 = vrot.slane %v833, %v840
    %v843 = vunpack.c.l.s4 1966171168
    %v844 = vunpack.c.0.s8 %v843
    %v845 = vlaneseq
    %v846 = vshrl.u32 %v845, 7
    %v847 = vsub.s32 %v844, %v846
    %v848 = vrot.slane %v834, %v847
    %v849 = vcombine.low %v841, %v848
    %v851 = vunpack.c.l.s4 1966171168
    %v852 = vunpack.c.0.s8 %v851
    %v853 = vlaneseq
    %v854 = vshrl.u32 %v853, 7
    %v855 = vsub.s32 %v852, %v854
    %v856 = vrot.slane %v849, %v855
    %v858 = vmul.f32 %v747, %v856
    %v860 = vlaneseq
    %v861 = vshrl.u32 %v860, 7
    %v862 = vsub.s32 0, %v861
    %v863 = vrot.slane %v858, %v862
    %v864 = vlaneseq
    %v865 = vshrl.u32 %v864, 7
    %v866 = vsub.s32 1, %v865
    %v867 = vrot.slane %v858, %v866
    %v868 = vlaneseq
    %v869 = vshrl.u32 %v868, 7
    %v870 = vsub.s32 2, %v869
    %v871 = vrot.slane %v858, %v870
    %v872 = vlaneseq
    %v873 = vshrl.u32 %v872, 7
    %v874 = vsub.s32 3, %v873
    %v875 = vrot.slane %v858, %v874
    %v880 = vmul.f32 %v801, %v863
    %v881 = vmul.f32 %v802, %v867
    %v882 = vmul.f32 %v803, %v871
    %v883 = vmul.f32 %v804, %v875
    %v888 = vcombine.low %v880, %v881
    %v889 = vcombine.low %v882, %v883
    %v891 = vunpack.c.l.s4 1966171168
    %v892 = vunpack.c.0.s8 %v891
    %v893 = vlaneseq
    %v894 = vshrl.u32 %v893, 7
    %v895 = vsub.s32 %v892, %v894
    %v896 = vrot.slane %v888, %v895
    %v898 = vunpack.c.l.s4 1966171168
    %v899 = vunpack.c.0.s8 %v898
    %v900 = vlaneseq
    %v901 = vshrl.u32 %v900, 7
    %v902 = vsub.s32 %v899, %v901
    %v903 = vrot.slane %v889, %v902
    %v904 = vcombine.low %v896, %v903
    %v906 = vunpack.c.l.s4 1966171168
    %v907 = vunpack.c.0.s8 %v906
    %v908 = vlaneseq
    %v909 = vshrl.u32 %v908, 7
    %v910 = vsub.s32 %v907, %v909
    %v911 = vrot.slane %v904, %v910
    %v913 = vsub.f32 %v748, %v911
    %v914 = vmul.f32 %v700, %v863
    %v915 = vmul.f32 %v702, %v867
    %v916 = vmul.f32 %v741, %v871
    %v917 = vmul.f32 %v743, %v875
    %v919 = vlaneseq
    %v920 = vshrl.u32 %v919, 7
    %v921 = vsub.s32 0, %v920
    %v922 = vrot.slane %v913, %v921
    %v923 = vlaneseq
    %v924 = vshrl.u32 %v923, 7
    %v925 = vsub.s32 1, %v924
    %v926 = vrot.slane %v913, %v925
    %v927 = vlaneseq
    %v928 = vshrl.u32 %v927, 7
    %v929 = vsub.s32 2, %v928
    %v930 = vrot.slane %v913, %v929
    %v931 = vlaneseq
    %v932 = vshrl.u32 %v931, 7
    %v933 = vsub.s32 3, %v932
    %v934 = vrot.slane %v913, %v933
    %v939 = vadd.f32 %v914, %v922
    %v940 = vadd.f32 %v915, %v926
    %v941 = vadd.f32 %v916, %v930
    %v942 = vadd.f32 %v917, %v934
    %v943 = vmax.f32 %v939, 0.0
    %v944 = vmax.f32 %v940, 0.0
    %v945 = vmax.f32 %v941, 0.0
    %v946 = vmax.f32 %v942, 0.0
    %v947 = vpack.c.bf16 %v943, %v943
    %v948 = vpack.c.bf16 %v944, %v944
    %v949 = vpack.c.bf16 %v945, %v945
    %v950 = vpack.c.bf16 %v946, %v946
    %v951 = vld [vmem:[#allocation11] sm:$0xf]
    %v952 = vld [vmem:[#allocation11 + $0x4] sm:$0xf]
    %v953 = vld [vmem:[#allocation11 + $0x8] sm:$0xf]
    %v954 = vld [vmem:[#allocation11 + $0xc] sm:$0xf]
    %v955 = vld [vmem:[#allocation11 + $0x10] sm:$0xf]
    %v956 = vld [vmem:[#allocation11 + $0x14] sm:$0xf]
    %v957 = vld [vmem:[#allocation11 + $0x18] sm:$0xf]
    %v958 = vld [vmem:[#allocation11 + $0x1c] sm:$0xf]
    %v959 = vld [vmem:[#allocation11 + $0x20] sm:$0xf]
    %v960 = vld [vmem:[#allocation11 + $0x24] sm:$0xf]
    %v961 = vld [vmem:[#allocation11 + $0x28] sm:$0xf]
    %v962 = vld [vmem:[#allocation11 + $0x2c] sm:$0xf]
    %v963 = vld [vmem:[#allocation11 + $0x30] sm:$0xf]
    %v964 = vld [vmem:[#allocation11 + $0x34] sm:$0xf]
    %v965 = vld [vmem:[#allocation11 + $0x38] sm:$0xf]
    %v966 = vld [vmem:[#allocation11 + $0x3c] sm:$0xf]
    %v967 = vld [vmem:[#allocation11 + $0x40] sm:$0xf]
    %v968 = vld [vmem:[#allocation11 + $0x44] sm:$0xf]
    %v969 = vld [vmem:[#allocation11 + $0x48] sm:$0xf]
    %v970 = vld [vmem:[#allocation11 + $0x4c] sm:$0xf]
    %v971 = vld [vmem:[#allocation11 + $0x50] sm:$0xf]
    %v972 = vld [vmem:[#allocation11 + $0x54] sm:$0xf]
    %v973 = vld [vmem:[#allocation11 + $0x58] sm:$0xf]
    %v974 = vld [vmem:[#allocation11 + $0x5c] sm:$0xf]
    %v975 = vld [vmem:[#allocation11 + $0x60] sm:$0xf]
    %v976 = vld [vmem:[#allocation11 + $0x64] sm:$0xf]
    %v977 = vld [vmem:[#allocation11 + $0x68] sm:$0xf]
    %v978 = vld [vmem:[#allocation11 + $0x6c] sm:$0xf]
    %v979 = vld [vmem:[#allocation11 + $0x70] sm:$0xf]
    %v980 = vld [vmem:[#allocation11 + $0x74] sm:$0xf]
    %v981 = vld [vmem:[#allocation11 + $0x78] sm:$0xf]
    %v982 = vld [vmem:[#allocation11 + $0x7c] sm:$0xf]
    %v983 = vld [vmem:[#allocation11 + $0x80] sm:$0xf]
    %v984 = vld [vmem:[#allocation11 + $0x84] sm:$0xf]
    %v985 = vld [vmem:[#allocation11 + $0x88] sm:$0xf]
    %v986 = vld [vmem:[#allocation11 + $0x8c] sm:$0xf]
    %v987 = vld [vmem:[#allocation11 + $0x90] sm:$0xf]
    %v988 = vld [vmem:[#allocation11 + $0x94] sm:$0xf]
    %v989 = vld [vmem:[#allocation11 + $0x98] sm:$0xf]
    %v990 = vld [vmem:[#allocation11 + $0x9c] sm:$0xf]
    %v991 = vld [vmem:[#allocation11 + $0xa0] sm:$0xf]
    %v992 = vld [vmem:[#allocation11 + $0xa4] sm:$0xf]
    %v993 = vld [vmem:[#allocation11 + $0xa8] sm:$0xf]
    %v994 = vld [vmem:[#allocation11 + $0xac] sm:$0xf]
    %v995 = vld [vmem:[#allocation11 + $0xb0] sm:$0xf]
    %v996 = vld [vmem:[#allocation11 + $0xb4] sm:$0xf]
    %v997 = vld [vmem:[#allocation11 + $0xb8] sm:$0xf]
    %v998 = vld [vmem:[#allocation11 + $0xbc] sm:$0xf]
    %v999 = vld [vmem:[#allocation11 + $0xc0] sm:$0xf]
    %v1000 = vld [vmem:[#allocation11 + $0xc4] sm:$0xf]
    %v1001 = vld [vmem:[#allocation11 + $0xc8] sm:$0xf]
    %v1002 = vld [vmem:[#allocation11 + $0xcc] sm:$0xf]
    %v1003 = vld [vmem:[#allocation11 + $0xd0] sm:$0xf]
    %v1004 = vld [vmem:[#allocation11 + $0xd4] sm:$0xf]
    %v1005 = vld [vmem:[#allocation11 + $0xd8] sm:$0xf]
    %v1006 = vld [vmem:[#allocation11 + $0xdc] sm:$0xf]
    %v1007 = vld [vmem:[#allocation11 + $0xe0] sm:$0xf]
    %v1008 = vld [vmem:[#allocation11 + $0xe4] sm:$0xf]
    %v1009 = vld [vmem:[#allocation11 + $0xe8] sm:$0xf]
    %v1010 = vld [vmem:[#allocation11 + $0xec] sm:$0xf]
    %v1011 = vld [vmem:[#allocation11 + $0xf0] sm:$0xf]
    %v1012 = vld [vmem:[#allocation11 + $0xf4] sm:$0xf]
    %v1013 = vld [vmem:[#allocation11 + $0xf8] sm:$0xf]
    %v1014 = vld [vmem:[#allocation11 + $0xfc] sm:$0xf]
    %v1015 = vld [vmem:[%s8] sm:$0x1]
    %v1017 = vlaneseq
    %v1018 = vshrl.u32 %v1017, 7
    %v1019 = vsub.s32 0, %v1018
    %v1020 = vrot.slane %v1015, %v1019
    %v1086 = vunpack.c.l.b16 %v951
    %v1087 = vunpack.c.l.b16 %v952
    %v1088 = vunpack.c.l.b16 %v953
    %v1089 = vunpack.c.l.b16 %v954
    %v1090 = vunpack.c.l.b16 %v955
    %v1091 = vunpack.c.l.b16 %v956
    %v1092 = vunpack.c.l.b16 %v957
    %v1093 = vunpack.c.l.b16 %v958
    %v1094 = vunpack.c.l.b16 %v959
    %v1095 = vunpack.c.l.b16 %v960
    %v1096 = vunpack.c.l.b16 %v961
    %v1097 = vunpack.c.l.b16 %v962
    %v1098 = vunpack.c.l.b16 %v963
    %v1099 = vunpack.c.l.b16 %v964
    %v1100 = vunpack.c.l.b16 %v965
    %v1101 = vunpack.c.l.b16 %v966
    %v1102 = vunpack.c.l.b16 %v967
    %v1103 = vunpack.c.l.b16 %v968
    %v1104 = vunpack.c.l.b16 %v969
    %v1105 = vunpack.c.l.b16 %v970
    %v1106 = vunpack.c.l.b16 %v971
    %v1107 = vunpack.c.l.b16 %v972
    %v1108 = vunpack.c.l.b16 %v973
    %v1109 = vunpack.c.l.b16 %v974
    %v1110 = vunpack.c.l.b16 %v975
    %v1111 = vunpack.c.l.b16 %v976
    %v1112 = vunpack.c.l.b16 %v977
    %v1113 = vunpack.c.l.b16 %v978
    %v1114 = vunpack.c.l.b16 %v979
    %v1115 = vunpack.c.l.b16 %v980
    %v1116 = vunpack.c.l.b16 %v981
    %v1117 = vunpack.c.l.b16 %v982
    %v1118 = vunpack.c.l.b16 %v983
    %v1119 = vunpack.c.l.b16 %v984
    %v1120 = vunpack.c.l.b16 %v985
    %v1121 = vunpack.c.l.b16 %v986
    %v1122 = vunpack.c.l.b16 %v987
    %v1123 = vunpack.c.l.b16 %v988
    %v1124 = vunpack.c.l.b16 %v989
    %v1125 = vunpack.c.l.b16 %v990
    %v1126 = vunpack.c.l.b16 %v991
    %v1127 = vunpack.c.l.b16 %v992
    %v1128 = vunpack.c.l.b16 %v993
    %v1129 = vunpack.c.l.b16 %v994
    %v1130 = vunpack.c.l.b16 %v995
    %v1131 = vunpack.c.l.b16 %v996
    %v1132 = vunpack.c.l.b16 %v997
    %v1133 = vunpack.c.l.b16 %v998
    %v1134 = vunpack.c.l.b16 %v999
    %v1135 = vunpack.c.l.b16 %v1000
    %v1136 = vunpack.c.l.b16 %v1001
    %v1137 = vunpack.c.l.b16 %v1002
    %v1138 = vunpack.c.l.b16 %v1003
    %v1139 = vunpack.c.l.b16 %v1004
    %v1140 = vunpack.c.l.b16 %v1005
    %v1141 = vunpack.c.l.b16 %v1006
    %v1142 = vunpack.c.l.b16 %v1007
    %v1143 = vunpack.c.l.b16 %v1008
    %v1144 = vunpack.c.l.b16 %v1009
    %v1145 = vunpack.c.l.b16 %v1010
    %v1146 = vunpack.c.l.b16 %v1011
    %v1147 = vunpack.c.l.b16 %v1012
    %v1148 = vunpack.c.l.b16 %v1013
    %v1149 = vunpack.c.l.b16 %v1014
    %v1150 = vpack.c.b16 %v1087, %v1086
    %v1151 = vpack.c.b16 %v1089, %v1088
    %v1152 = vpack.c.b16 %v1091, %v1090
    %v1153 = vpack.c.b16 %v1093, %v1092
    %v1154 = vpack.c.b16 %v1095, %v1094
    %v1155 = vpack.c.b16 %v1097, %v1096
    %v1156 = vpack.c.b16 %v1099, %v1098
    %v1157 = vpack.c.b16 %v1101, %v1100
    %v1158 = vpack.c.b16 %v1103, %v1102
    %v1159 = vpack.c.b16 %v1105, %v1104
    %v1160 = vpack.c.b16 %v1107, %v1106
    %v1161 = vpack.c.b16 %v1109, %v1108
    %v1162 = vpack.c.b16 %v1111, %v1110
    %v1163 = vpack.c.b16 %v1113, %v1112
    %v1164 = vpack.c.b16 %v1115, %v1114
    %v1165 = vpack.c.b16 %v1117, %v1116
    %v1166 = vpack.c.b16 %v1119, %v1118
    %v1167 = vpack.c.b16 %v1121, %v1120
    %v1168 = vpack.c.b16 %v1123, %v1122
    %v1169 = vpack.c.b16 %v1125, %v1124
    %v1170 = vpack.c.b16 %v1127, %v1126
    %v1171 = vpack.c.b16 %v1129, %v1128
    %v1172 = vpack.c.b16 %v1131, %v1130
    %v1173 = vpack.c.b16 %v1133, %v1132
    %v1174 = vpack.c.b16 %v1135, %v1134
    %v1175 = vpack.c.b16 %v1137, %v1136
    %v1176 = vpack.c.b16 %v1139, %v1138
    %v1177 = vpack.c.b16 %v1141, %v1140
    %v1178 = vpack.c.b16 %v1143, %v1142
    %v1179 = vpack.c.b16 %v1145, %v1144
    %v1180 = vpack.c.b16 %v1147, %v1146
    %v1181 = vpack.c.b16 %v1149, %v1148
    %1214 = vmatprep.subr.bf16.mxu0 0
    %1215 = vmatpush1.bf16.msra.mxu0 %v1157
    %1216 = vmatprep.subr.bf16.mxu0 0
    %1217 = vmatpush1.bf16.msra.mxu0 %v1156
    %1218 = vmatprep.subr.bf16.mxu0 0
    %1219 = vmatpush1.bf16.msra.mxu0 %v1155
    %1220 = vmatprep.subr.bf16.mxu0 0
    %1221 = vmatpush1.bf16.msra.mxu0 %v1154
    %1222 = vmatprep.subr.bf16.mxu0 0
    %1223 = vmatpush1.bf16.msra.mxu0 %v1153
    %1224 = vmatprep.subr.bf16.mxu0 0
    %1225 = vmatpush1.bf16.msra.mxu0 %v1152
    %1226 = vmatprep.subr.bf16.mxu0 0
    %1227 = vmatpush1.bf16.msra.mxu0 %v1151
    %1228 = vmatprep.subr.bf16.mxu0 0
    %1229 = vmatpush1.bf16.msra.mxu0 %v1150
    %1230 = vmatprep.subr.bf16.mxu0 0
    %1231 = vmatpush2.bf16.msra.mxu0 %v1165
    %1232 = vmatprep.subr.bf16.mxu0 0
    %1233 = vmatpush2.bf16.msra.mxu0 %v1164
    %1234 = vmatprep.subr.bf16.mxu0 0
    %1235 = vmatpush2.bf16.msra.mxu0 %v1163
    %1236 = vmatprep.subr.bf16.mxu0 0
    %1237 = vmatpush2.bf16.msra.mxu0 %v1162
    %1238 = vmatprep.subr.bf16.mxu0 0
    %1239 = vmatpush2.bf16.msra.mxu0 %v1161
    %1240 = vmatprep.subr.bf16.mxu0 0
    %1241 = vmatpush2.bf16.msra.mxu0 %v1160
    %1242 = vmatprep.subr.bf16.mxu0 0
    %1243 = vmatpush2.bf16.msra.mxu0 %v1159
    %1244 = vmatprep.subr.bf16.mxu0 0
    %1245 = vmatpush2.bf16.msra.mxu0 %v1158
    %1246 = vmatprep.mubr.bf16.mxu0 %v948
    %1247 = vmatmul.mubr.bf16.gmra.mxu0 %v947
    %v1248 = vpop.f32.mrf.mxu0
    %v1249 = vadd.f32 %v1020, %v1248
    %v1250 = vpop.f32.mrf.mxu0
    %v1251 = vpop.f32.mrf.mxu0
    %v1252 = vpop.f32.mrf.mxu0
    %1253 = vdwg.mxu0
    %1254 = vmatprep.subr.bf16.mxu0 0
    %1255 = vmatpush1.bf16.msra.mxu0 %v1173
    %1256 = vmatprep.subr.bf16.mxu0 0
    %1257 = vmatpush1.bf16.msra.mxu0 %v1172
    %1258 = vmatprep.subr.bf16.mxu0 0
    %1259 = vmatpush1.bf16.msra.mxu0 %v1171
    %1260 = vmatprep.subr.bf16.mxu0 0
    %1261 = vmatpush1.bf16.msra.mxu0 %v1170
    %1262 = vmatprep.subr.bf16.mxu0 0
    %1263 = vmatpush1.bf16.msra.mxu0 %v1169
    %1264 = vmatprep.subr.bf16.mxu0 0
    %1265 = vmatpush1.bf16.msra.mxu0 %v1168
    %1266 = vmatprep.subr.bf16.mxu0 0
    %1267 = vmatpush1.bf16.msra.mxu0 %v1167
    %1268 = vmatprep.subr.bf16.mxu0 0
    %1269 = vmatpush1.bf16.msra.mxu0 %v1166
    %1270 = vmatprep.subr.bf16.mxu0 0
    %1271 = vmatpush2.bf16.msra.mxu0 %v1181
    %1272 = vmatprep.subr.bf16.mxu0 0
    %1273 = vmatpush2.bf16.msra.mxu0 %v1180
    %1274 = vmatprep.subr.bf16.mxu0 0
    %1275 = vmatpush2.bf16.msra.mxu0 %v1179
    %1276 = vmatprep.subr.bf16.mxu0 0
    %1277 = vmatpush2.bf16.msra.mxu0 %v1178
    %1278 = vmatprep.subr.bf16.mxu0 0
    %1279 = vmatpush2.bf16.msra.mxu0 %v1177
    %1280 = vmatprep.subr.bf16.mxu0 0
    %1281 = vmatpush2.bf16.msra.mxu0 %v1176
    %1282 = vmatprep.subr.bf16.mxu0 0
    %1283 = vmatpush2.bf16.msra.mxu0 %v1175
    %1284 = vmatprep.subr.bf16.mxu0 0
    %1285 = vmatpush2.bf16.msra.mxu0 %v1174
    %1286 = vmatprep.mubr.bf16.mxu0 %v950
    %1287 = vmatmul.mubr.bf16.gmra.mxu0 %v949
    %v1288 = vpop.f32.mrf.mxu0
    %v1289 = vadd.f32 %v1249, %v1288
    %v1290 = vpop.f32.mrf.mxu0
    %v1291 = vpop.f32.mrf.mxu0
    %v1292 = vpop.f32.mrf.mxu0
    %1293 = vdwg.mxu0
    %1294 = vst [vmem:[#allocation13] sm:$0xff] %v1289
    // Predicated region
    $region62: #{tpu_custom_call.1} parent=1 // pred_check
      _
    $region63: #{tpu_custom_call.1} parent=1 // pred_check_branch
      %1296 = sbr.rel (0) target = $region65
    $region64: #{tpu_custom_call.1} parent=1 // pred_region
      %s1298 = ssub.s32 128, 128
      %1299 = vsyncadd [#allocation4], %s1298
      %s1301 = sshll.u32 [#allocation13], 4
      %s1302 = int_to_ptr.vmem [resolvable:$true] %s1301
      %1304 = dma.vmem_to_hbm [thread:$0]  %s1302, 128, %s9, [#allocation4]
    $region65: #{tpu_custom_call.1} parent=1 // pred_fallthru
      _
    // Predicated region
    $region66: #{tpu_custom_call.1} parent=1 // pred_check
      _
    $region67: #{tpu_custom_call.1} parent=1 // pred_check_branch
      %1306 = sbr.rel (0) target = $region69
    $region68: #{tpu_custom_call.1} parent=1 // pred_region
      %1307 = dma.done [#allocation4], 128
    $region69: #{tpu_custom_call.1} parent=1 // pred_fallthru
      _
    %1308 = vsyncpa [#allocation3], 1
    %1309 = vsyncpa [#allocation6], 1
    %1310 = vsyncpa [#allocation9], 1
    %1311 = vsyncpa [#allocation12], 1
    %1312 = vsyncpa [#allocation4], 1

</llo_original>
